<compile_context>
chip_gen: v5e
topology: v5e:2x2
jax: 0.10.0
libtpu: 0.0.40
codegen_flags: <defaults>
</compile_context>

<pallas_src>
import jax
import jax.numpy as jnp
from jax.experimental import pallas as pl
from jax.experimental.pallas import tpu as pltpu


# --------------------------------------------------------------------------- #
# Fused ResNetBlock kernel
# --------------------------------------------------------------------------- #
def _make_fused_resnet_kernel(C_in, C_out, L, Ks, has_res):
    K1, K2, K3 = Ks
    p2l, p2r = (K2 - 1) // 2, K2 // 2
    p3l, p3r = (K3 - 1) // 2, K3 // 2
    W2 = L + p3l + p3r                     # stage-3 input window  [-p3l, L+p3r)
    W1 = W2 + p2l + p2r                    # stage-2 input window  [-(p2l+p3l), ...)
    halo_l = (K1 - 1) // 2 + p2l + p3l     # leftmost x position touched = -halo_l

    scratch_shapes = [
        pltpu.VMEM((K1 * C_in, W1), jnp.float32),   # im2col slab, stage 1
        pltpu.VMEM((K2 * C_out, W2), jnp.float32),  # im2col slab, stage 2
        pltpu.VMEM((K3 * C_out, L), jnp.float32),   # im2col slab, stage 3
    ]

    def kernel(*refs):
        if has_res:
            (x_ref, w1_ref, w2_ref, w3_ref, wr_ref, sb_ref,
             o_ref, slab1, slab2, slab3) = refs
        else:
            (x_ref, w1_ref, w2_ref, w3_ref, sb_ref,
             o_ref, slab1, slab2, slab3) = refs

        x = x_ref[0].astype(jnp.float32)                       # (C_in, L)

        def bn(y, col, relu=True):
            y = y * sb_ref[:, col:col + 1] + sb_ref[:, col + 1:col + 2]
            return jnp.maximum(y, 0.0) if relu else y

        def conv(w_ref, slab_ref):
            # one MXU matmul per stage: bf16 operands, fp32 accumulation
            return jnp.dot(w_ref[...], slab_ref[...].astype(jnp.bfloat16),
                           preferred_element_type=jnp.float32)

        # ---- stage 1: Conv1dSame(K1) + BN + ReLU over the extended window W1 --
        # slab1[t*C_in + c, j] = x[c, j + t - halo_l], zero when outside [0, L)
        for t in range(K1):
            r0, r1 = t * C_in, (t + 1) * C_in
            j_lo = max(0, halo_l - t)
            j_hi = max(j_lo, min(W1, halo_l - t + L))
            if j_lo > 0:
                slab1[r0:r1, 0:j_lo] = jnp.zeros((C_in, j_lo), jnp.float32)
            if j_hi < W1:
                slab1[r0:r1, j_hi:W1] = jnp.zeros((C_in, W1 - j_hi), jnp.float32)
            if j_hi > j_lo:
                slab1[r0:r1, j_lo:j_hi] = x[:, j_lo + t - halo_l:j_hi + t - halo_l]
        h1 = bn(conv(w1_ref, slab1), 0)
        # positions outside the true sequence must be exactly zero: the next
        # conv's "same" padding pads the *activations* with zeros.
        pos = jax.lax.broadcasted_iota(jnp.int32, (1, W1), 1)
        h1 = jnp.where((pos >= p2l + p3l) & (pos < p2l + p3l + L), h1, 0.0)

        # ---- stage 2: Conv1dSame(K2) + BN + ReLU over window W2 ----
        for t in range(K2):
            slab2[t * C_out:(t + 1) * C_out, :] = h1[:, t:t + W2]
        h2 = bn(conv(w2_ref, slab2), 2)
        pos = jax.lax.broadcasted_iota(jnp.int32, (1, W2), 1)
        h2 = jnp.where((pos >= p3l) & (pos < p3l + L), h2, 0.0)

        # ---- stage 3: Conv1dSame(K3) + BN + ReLU, exactly [0, L) ----
        for t in range(K3):
            slab3[t * C_out:(t + 1) * C_out, :] = h2[:, t:t + L]
        h3 = bn(conv(w3_ref, slab3), 4)

        # ---- residual branch: 1x1 conv + BN (no ReLU), fused add ----
        if has_res:
            r = jnp.dot(wr_ref[...], x.astype(jnp.bfloat16),
                        preferred_element_type=jnp.float32)
            h3 = h3 + bn(r, 6, relu=False)

        o_ref[0] = h3.astype(o_ref.dtype)

    return kernel, scratch_shapes


# --------------------------------------------------------------------------- #
# Wrapper: fold BN, reshape weights for im2col, launch the fused kernel
# --------------------------------------------------------------------------- #
def resnet_block_forward(params, x, *, eps=1e-5):
    N, C_in, L = x.shape
    blocks = params["blocks"]
    C_out = blocks[0]["w"].shape[0]
    has_res = params["residual"] is not None
    Ks = tuple(int(b["w"].shape[-1]) for b in blocks)       # (8, 5, 3)

    def fold(p):
        inv = jax.lax.rsqrt(p["var"] + eps)
        scale = p["gamma"] * inv
        bias = (p["b"] - p["mean"]) * scale + p["beta"]
        return scale.astype(jnp.float32), bias.astype(jnp.float32)

    # im2col weight layout: w_mat[co, t*C + c] = w[co, c, t]; cast to bf16.
    w_mats, sb_cols = [], []
    for p in blocks:
        co, ci, k = p["w"].shape
        w_mats.append(jnp.transpose(p["w"], (0, 2, 1))
                      .reshape(co, k * ci).astype(jnp.bfloat16))
        s, b = fold(p)
        sb_cols += [s, b]
    if has_res:
        r = params["residual"]
        wr = r["w"][:, :, 0].astype(jnp.bfloat16)            # (C_out, C_in)
        s, b = fold(r)
        sb_cols += [s, b]
    sb = jnp.stack(sb_cols, axis=1).astype(jnp.float32)      # (C_out, 6 or 8)

    kernel, scratch_shapes = _make_fused_resnet_kernel(C_in, C_out, L, Ks, has_res)

    in_specs = [
        pl.BlockSpec((1, C_in, L), lambda n: (n, 0, 0)),     # x
        pl.BlockSpec(w_mats[0].shape, lambda n: (0, 0)),
        pl.BlockSpec(w_mats[1].shape, lambda n: (0, 0)),
        pl.BlockSpec(w_mats[2].shape, lambda n: (0, 0)),
    ]
    args = [x] + w_mats
    if has_res:
        in_specs.append(pl.BlockSpec(wr.shape, lambda n: (0, 0)))
        args.append(wr)
    in_specs.append(pl.BlockSpec(sb.shape, lambda n: (0, 0)))
    args.append(sb)

    return pl.pallas_call(
        kernel,
        out_shape=jax.ShapeDtypeStruct((N, C_out, L), x.dtype),
        grid_spec=pltpu.PrefetchScalarGridSpec(
            num_scalar_prefetch=0,
            grid=(N,),
            in_specs=in_specs,
            out_specs=pl.BlockSpec((1, C_out, L), lambda n: (n, 0, 0)),
            scratch_shapes=scratch_shapes),
        compiler_params=pltpu.CompilerParams(
            dimension_semantics=("parallel",)),
    )(*args)


# --------------------------------------------------------------------------- #
# Parameter init (deterministic, synthetic)
# --------------------------------------------------------------------------- #
def init_conv_bn(key, c_in, c_out, k):
    kw, kb, kg, kbe, km, kv = jax.random.split(key, 6)
    fan = c_in * k
    return dict(
        w=jax.random.normal(kw, (c_out, c_in, k), jnp.float32) / jnp.sqrt(fan),
        b=0.1 * jax.random.normal(kb, (c_out,), jnp.float32),
        gamma=1.0 + 0.1 * jax.random.normal(kg, (c_out,), jnp.float32),
        beta=0.1 * jax.random.normal(kbe, (c_out,), jnp.float32),
        mean=0.1 * jax.random.normal(km, (c_out,), jnp.float32),
        var=0.5 + jnp.abs(jax.random.normal(kv, (c_out,), jnp.float32)),
    )


def init_resnet_block(key, in_channels, out_channels):
    channels = [in_channels, out_channels, out_channels, out_channels]
    kernel_sizes = [8, 5, 3]
    keys = jax.random.split(key, 4)
    params = {
        "blocks": [
            init_conv_bn(keys[i], channels[i], channels[i + 1], kernel_sizes[i])
            for i in range(3)
        ],
        "residual": None,
    }
    if in_channels != out_channels:
        params["residual"] = init_conv_bn(keys[3], in_channels, out_channels, 1)
    return params


# --------------------------------------------------------------------------- #
# Pure-JAX fp32 reference (for correctness check)
# --------------------------------------------------------------------------- #
def ref_conv_bn(x, p, relu, eps=1e-5):
    K = p["w"].shape[-1]
    pad_l, pad_r = (K - 1) // 2, K // 2
    y = jax.lax.conv_general_dilated(
        x, p["w"], window_strides=(1,), padding=[(pad_l, pad_r)],
        dimension_numbers=("NCH", "OIH", "NCH"))
    y = y + p["b"][None, :, None]
    y = (y - p["mean"][None, :, None]) / jnp.sqrt(p["var"][None, :, None] + eps)
    y = y * p["gamma"][None, :, None] + p["beta"][None, :, None]
    return jnp.maximum(y, 0.0) if relu else y


def ref_resnet_block(params, x):
    h = x
    for blk in params["blocks"]:
        h = ref_conv_bn(h, blk, relu=True)
    if params["residual"] is not None:
        h = h + ref_conv_bn(x, params["residual"], relu=False)
    return h


# --------------------------------------------------------------------------- #
if __name__ == "__main__":
    key = jax.random.PRNGKey(0)
    k_param, k_param2, k_x = jax.random.split(key, 3)

    N, C_IN, C_OUT, L = 2, 4, 8, 16   # C_IN != C_OUT -> residual branch active
    params = init_resnet_block(k_param, C_IN, C_OUT)
    x = jax.random.normal(k_x, (N, C_IN, L), jnp.float32)

    fwd = jax.jit(resnet_block_forward)
    out = jax.block_until_ready(fwd(params, x))
    ref = ref_resnet_block(params, x)
    assert out.shape == (N, C_OUT, L)
    # bf16 matmul operands with fp32 accumulation -> compare to fp32 ref loosely
    assert jnp.allclose(out, ref, rtol=5e-2, atol=5e-2), "mismatch (residual path)"

    # identity-channel variant (module skips the residual branch entirely)
    params2 = init_resnet_block(k_param2, C_OUT, C_OUT)
    x2 = jax.random.normal(k_x, (N, C_OUT, L), jnp.float32)
    out2 = jax.block_until_ready(fwd(params2, x2))
    ref2 = ref_resnet_block(params2, x2)
    assert jnp.allclose(out2, ref2, rtol=5e-2, atol=5e-2), "mismatch (no-residual path)"

    print("KERNEL_OK")
</pallas_src>

<mosaic_0001>
module attributes {stable_mosaic.version = 11 : i64} {
  func.func @kernel(%arg0: i32, %arg1: memref<1x4x16xf32, #tpu.memory_space<vmem>>, %arg2: memref<8x32xbf16, #tpu.memory_space<vmem>>, %arg3: memref<8x40xbf16, #tpu.memory_space<vmem>>, %arg4: memref<8x24xbf16, #tpu.memory_space<vmem>>, %arg5: memref<8x4xbf16, #tpu.memory_space<vmem>>, %arg6: memref<8x8xf32, #tpu.memory_space<vmem>>, %arg7: memref<1x8x16xf32, #tpu.memory_space<vmem>>, %arg8: memref<32x22xf32, #tpu.memory_space<vmem>>, %arg9: memref<40x18xf32, #tpu.memory_space<vmem>>, %arg10: memref<24x16xf32, #tpu.memory_space<vmem>>) attributes {dimension_semantics = [#tpu.dimension_semantics<parallel>], iteration_bounds = array<i64: 2>, scalar_prefetch = 0 : i64, scratch_operands = 3 : i64, tpu.core_type = #tpu.core_type<tc>, window_params = [{transform_indices = @transform_0, window_bounds = array<i64: 1, 4, 16>}, {pipeline_mode = #tpu.pipeline_mode<synchronous>, transform_indices = @transform_1, window_bounds = array<i64: 8, 32>}, {pipeline_mode = #tpu.pipeline_mode<synchronous>, transform_indices = @transform_2, window_bounds = array<i64: 8, 40>}, {pipeline_mode = #tpu.pipeline_mode<synchronous>, transform_indices = @transform_3, window_bounds = array<i64: 8, 24>}, {pipeline_mode = #tpu.pipeline_mode<synchronous>, transform_indices = @transform_4, window_bounds = array<i64: 8, 4>}, {pipeline_mode = #tpu.pipeline_mode<synchronous>, transform_indices = @transform_5, window_bounds = array<i64: 8, 8>}, {transform_indices = @transform_6, window_bounds = array<i64: 1, 8, 16>}]} {
    %c0 = arith.constant 0 : index
    %c0_0 = arith.constant 0 : index
    %c0_1 = arith.constant 0 : index
    %0 = vector.load %arg1[%c0, %c0_0, %c0_1] : memref<1x4x16xf32, #tpu.memory_space<vmem>>, vector<1x4x16xf32>
    %1 = vector.shape_cast %0 : vector<1x4x16xf32> to vector<4x16xf32>
    %cst = arith.constant 0.000000e+00 : f32
    %2 = vector.broadcast %cst : f32 to vector<4x6xf32>
    %c0_2 = arith.constant 0 : index
    %c0_3 = arith.constant 0 : index
    %3 = vector.load %arg8[%c0_2, %c0_3] : memref<32x22xf32, #tpu.memory_space<vmem>>, vector<4x6xf32>
    tpu.vector_store %arg8[%c0_2, %c0_3], %2 {strides = array<i32>} : memref<32x22xf32, #tpu.memory_space<vmem>>, vector<4x6xf32>,
    %c0_4 = arith.constant 0 : index
    %c6 = arith.constant 6 : index
    %4 = vector.load %arg8[%c0_4, %c6] : memref<32x22xf32, #tpu.memory_space<vmem>>, vector<4x16xf32>
    tpu.vector_store %arg8[%c0_4, %c6], %1 {strides = array<i32>} : memref<32x22xf32, #tpu.memory_space<vmem>>, vector<4x16xf32>,
    %cst_5 = arith.constant 0.000000e+00 : f32
    %5 = vector.broadcast %cst_5 : f32 to vector<4x5xf32>
    %c4 = arith.constant 4 : index
    %c0_6 = arith.constant 0 : index
    %6 = vector.load %arg8[%c4, %c0_6] : memref<32x22xf32, #tpu.memory_space<vmem>>, vector<4x5xf32>
    tpu.vector_store %arg8[%c4, %c0_6], %5 {strides = array<i32>} : memref<32x22xf32, #tpu.memory_space<vmem>>, vector<4x5xf32>,
    %cst_7 = arith.constant 0.000000e+00 : f32
    %7 = vector.broadcast %cst_7 : f32 to vector<4x1xf32>
    %c4_8 = arith.constant 4 : index
    %c21 = arith.constant 21 : index
    %8 = vector.load %arg8[%c4_8, %c21] : memref<32x22xf32, #tpu.memory_space<vmem>>, vector<4x1xf32>
    tpu.vector_store %arg8[%c4_8, %c21], %7 {strides = array<i32>} : memref<32x22xf32, #tpu.memory_space<vmem>>, vector<4x1xf32>,
    %c4_9 = arith.constant 4 : index
    %c5 = arith.constant 5 : index
    %9 = vector.load %arg8[%c4_9, %c5] : memref<32x22xf32, #tpu.memory_space<vmem>>, vector<4x16xf32>
    tpu.vector_store %arg8[%c4_9, %c5], %1 {strides = array<i32>} : memref<32x22xf32, #tpu.memory_space<vmem>>, vector<4x16xf32>,
    %cst_10 = arith.constant 0.000000e+00 : f32
    %10 = vector.broadcast %cst_10 : f32 to vector<4x4xf32>
    %c8 = arith.constant 8 : index
    %c0_11 = arith.constant 0 : index
    %11 = vector.load %arg8[%c8, %c0_11] : memref<32x22xf32, #tpu.memory_space<vmem>>, vector<4x4xf32>
    tpu.vector_store %arg8[%c8, %c0_11], %10 {strides = array<i32>} : memref<32x22xf32, #tpu.memory_space<vmem>>, vector<4x4xf32>,
    %cst_12 = arith.constant 0.000000e+00 : f32
    %12 = vector.broadcast %cst_12 : f32 to vector<4x2xf32>
    %c8_13 = arith.constant 8 : index
    %c20 = arith.constant 20 : index
    %13 = vector.load %arg8[%c8_13, %c20] : memref<32x22xf32, #tpu.memory_space<vmem>>, vector<4x2xf32>
    tpu.vector_store %arg8[%c8_13, %c20], %12 {strides = array<i32>} : memref<32x22xf32, #tpu.memory_space<vmem>>, vector<4x2xf32>,
    %c8_14 = arith.constant 8 : index
    %c4_15 = arith.constant 4 : index
    %14 = vector.load %arg8[%c8_14, %c4_15] : memref<32x22xf32, #tpu.memory_space<vmem>>, vector<4x16xf32>
    tpu.vector_store %arg8[%c8_14, %c4_15], %1 {strides = array<i32>} : memref<32x22xf32, #tpu.memory_space<vmem>>, vector<4x16xf32>,
    %cst_16 = arith.constant 0.000000e+00 : f32
    %15 = vector.broadcast %cst_16 : f32 to vector<4x3xf32>
    %c12 = arith.constant 12 : index
    %c0_17 = arith.constant 0 : index
    %16 = vector.load %arg8[%c12, %c0_17] : memref<32x22xf32, #tpu.memory_space<vmem>>, vector<4x3xf32>
    tpu.vector_store %arg8[%c12, %c0_17], %15 {strides = array<i32>} : memref<32x22xf32, #tpu.memory_space<vmem>>, vector<4x3xf32>,
    %cst_18 = arith.constant 0.000000e+00 : f32
    %17 = vector.broadcast %cst_18 : f32 to vector<4x3xf32>
    %c12_19 = arith.constant 12 : index
    %c19 = arith.constant 19 : index
    %18 = vector.load %arg8[%c12_19, %c19] : memref<32x22xf32, #tpu.memory_space<vmem>>, vector<4x3xf32>
    tpu.vector_store %arg8[%c12_19, %c19], %17 {strides = array<i32>} : memref<32x22xf32, #tpu.memory_space<vmem>>, vector<4x3xf32>,
    %c12_20 = arith.constant 12 : index
    %c3 = arith.constant 3 : index
    %19 = vector.load %arg8[%c12_20, %c3] : memref<32x22xf32, #tpu.memory_space<vmem>>, vector<4x16xf32>
    tpu.vector_store %arg8[%c12_20, %c3], %1 {strides = array<i32>} : memref<32x22xf32, #tpu.memory_space<vmem>>, vector<4x16xf32>,
    %cst_21 = arith.constant 0.000000e+00 : f32
    %20 = vector.broadcast %cst_21 : f32 to vector<4x2xf32>
    %c16 = arith.constant 16 : index
    %c0_22 = arith.constant 0 : index
    %21 = vector.load %arg8[%c16, %c0_22] : memref<32x22xf32, #tpu.memory_space<vmem>>, vector<4x2xf32>
    tpu.vector_store %arg8[%c16, %c0_22], %20 {strides = array<i32>} : memref<32x22xf32, #tpu.memory_space<vmem>>, vector<4x2xf32>,
    %cst_23 = arith.constant 0.000000e+00 : f32
    %22 = vector.broadcast %cst_23 : f32 to vector<4x4xf32>
    %c16_24 = arith.constant 16 : index
    %c18 = arith.constant 18 : index
    %23 = vector.load %arg8[%c16_24, %c18] : memref<32x22xf32, #tpu.memory_space<vmem>>, vector<4x4xf32>
    tpu.vector_store %arg8[%c16_24, %c18], %22 {strides = array<i32>} : memref<32x22xf32, #tpu.memory_space<vmem>>, vector<4x4xf32>,
    %c16_25 = arith.constant 16 : index
    %c2 = arith.constant 2 : index
    %24 = vector.load %arg8[%c16_25, %c2] : memref<32x22xf32, #tpu.memory_space<vmem>>, vector<4x16xf32>
    tpu.vector_store %arg8[%c16_25, %c2], %1 {strides = array<i32>} : memref<32x22xf32, #tpu.memory_space<vmem>>, vector<4x16xf32>,
    %cst_26 = arith.constant 0.000000e+00 : f32
    %25 = vector.broadcast %cst_26 : f32 to vector<4x1xf32>
    %c20_27 = arith.constant 20 : index
    %c0_28 = arith.constant 0 : index
    %26 = vector.load %arg8[%c20_27, %c0_28] : memref<32x22xf32, #tpu.memory_space<vmem>>, vector<4x1xf32>
    tpu.vector_store %arg8[%c20_27, %c0_28], %25 {strides = array<i32>} : memref<32x22xf32, #tpu.memory_space<vmem>>, vector<4x1xf32>,
    %cst_29 = arith.constant 0.000000e+00 : f32
    %27 = vector.broadcast %cst_29 : f32 to vector<4x5xf32>
    %c20_30 = arith.constant 20 : index
    %c17 = arith.constant 17 : index
    %28 = vector.load %arg8[%c20_30, %c17] : memref<32x22xf32, #tpu.memory_space<vmem>>, vector<4x5xf32>
    tpu.vector_store %arg8[%c20_30, %c17], %27 {strides = array<i32>} : memref<32x22xf32, #tpu.memory_space<vmem>>, vector<4x5xf32>,
    %c20_31 = arith.constant 20 : index
    %c1 = arith.constant 1 : index
    %29 = vector.load %arg8[%c20_31, %c1] : memref<32x22xf32, #tpu.memory_space<vmem>>, vector<4x16xf32>
    tpu.vector_store %arg8[%c20_31, %c1], %1 {strides = array<i32>} : memref<32x22xf32, #tpu.memory_space<vmem>>, vector<4x16xf32>,
    %cst_32 = arith.constant 0.000000e+00 : f32
    %30 = vector.broadcast %cst_32 : f32 to vector<4x6xf32>
    %c24 = arith.constant 24 : index
    %c16_33 = arith.constant 16 : index
    %31 = vector.load %arg8[%c24, %c16_33] : memref<32x22xf32, #tpu.memory_space<vmem>>, vector<4x6xf32>
    tpu.vector_store %arg8[%c24, %c16_33], %30 {strides = array<i32>} : memref<32x22xf32, #tpu.memory_space<vmem>>, vector<4x6xf32>,
    %c24_34 = arith.constant 24 : index
    %c0_35 = arith.constant 0 : index
    %32 = vector.load %arg8[%c24_34, %c0_35] : memref<32x22xf32, #tpu.memory_space<vmem>>, vector<4x16xf32>
    tpu.vector_store %arg8[%c24_34, %c0_35], %1 {strides = array<i32>} : memref<32x22xf32, #tpu.memory_space<vmem>>, vector<4x16xf32>,
    %cst_36 = arith.constant 0.000000e+00 : f32
    %33 = vector.broadcast %cst_36 : f32 to vector<4x7xf32>
    %c28 = arith.constant 28 : index
    %c15 = arith.constant 15 : index
    %34 = vector.load %arg8[%c28, %c15] : memref<32x22xf32, #tpu.memory_space<vmem>>, vector<4x7xf32>
    tpu.vector_store %arg8[%c28, %c15], %33 {strides = array<i32>} : memref<32x22xf32, #tpu.memory_space<vmem>>, vector<4x7xf32>,
    %35 = vector.extract_strided_slice %1 {offsets = [0, 1], sizes = [4, 15], strides = [1, 1]} : vector<4x16xf32> to vector<4x15xf32>
    %c28_37 = arith.constant 28 : index
    %c0_38 = arith.constant 0 : index
    %36 = vector.load %arg8[%c28_37, %c0_38] : memref<32x22xf32, #tpu.memory_space<vmem>>, vector<4x15xf32>
    tpu.vector_store %arg8[%c28_37, %c0_38], %35 {strides = array<i32>} : memref<32x22xf32, #tpu.memory_space<vmem>>, vector<4x15xf32>,
    %c0_39 = arith.constant 0 : index
    %c0_40 = arith.constant 0 : index
    %37 = vector.load %arg2[%c0_39, %c0_40] : memref<8x32xbf16, #tpu.memory_space<vmem>>, vector<8x32xbf16>
    %c0_41 = arith.constant 0 : index
    %c0_42 = arith.constant 0 : index
    %38 = vector.load %arg8[%c0_41, %c0_42] : memref<32x22xf32, #tpu.memory_space<vmem>>, vector<32x22xf32>
    %39 = arith.truncf %38 : vector<32x22xf32> to vector<32x22xbf16>
    %cst_43 = arith.constant dense<0.000000e+00> : vector<8x22xf32>
    %40 = tpu.matmul %37, %39, %cst_43 {dimension_numbers = #tpu.dot_dimension_numbers<[1], [0], [0], [1], [0, 0, 1, 1], [], []>} : vector<8x32xbf16>, vector<32x22xbf16>, vector<8x22xf32> -> vector<8x22xf32>
    %c0_44 = arith.constant 0 : index
    %c0_45 = arith.constant 0 : index
    %41 = vector.load %arg6[%c0_44, %c0_45] : memref<8x8xf32, #tpu.memory_space<vmem>>, vector<8x1xf32>
    %42 = vector.broadcast %41 : vector<8x1xf32> to vector<8x22xf32>
    %43 = arith.mulf %40, %42 : vector<8x22xf32>
    %c0_46 = arith.constant 0 : index
    %c1_47 = arith.constant 1 : index
    %44 = vector.load %arg6[%c0_46, %c1_47] : memref<8x8xf32, #tpu.memory_space<vmem>>, vector<8x1xf32>
    %45 = vector.broadcast %44 : vector<8x1xf32> to vector<8x22xf32>
    %46 = arith.addf %43, %45 : vector<8x22xf32>
    %cst_48 = arith.constant 0.000000e+00 : f32
    %47 = vector.broadcast %cst_48 : f32 to vector<8x22xf32>
    %48 = arith.maximumf %46, %47 : vector<8x22xf32>
    %49 = tpu.iota {dimensions = array<i32: 1>} : vector<1x22xi32>
    %c3_i32 = arith.constant 3 : i32
    %50 = vector.broadcast %c3_i32 : i32 to vector<1x22xi32>
    %51 = arith.cmpi sge, %49, %50 : vector<1x22xi32>
    %c19_i32 = arith.constant 19 : i32
    %52 = vector.broadcast %c19_i32 : i32 to vector<1x22xi32>
    %53 = arith.cmpi slt, %49, %52 : vector<1x22xi32>
    %54 = arith.andi %51, %53 : vector<1x22xi1>
    %cst_49 = arith.constant 0.000000e+00 : f32
    %55 = vector.shape_cast %54 : vector<1x22xi1> to vector<1x22xi1>
    %56 = vector.broadcast %55 : vector<1x22xi1> to vector<8x22xi1>
    %57 = vector.broadcast %cst_49 : f32 to vector<8x22xf32>
    %58 = arith.select %56, %48, %57 : vector<8x22xi1>, vector<8x22xf32>
    %59 = vector.extract_strided_slice %58 {offsets = [0, 0], sizes = [8, 18], strides = [1, 1]} : vector<8x22xf32> to vector<8x18xf32>
    %c0_50 = arith.constant 0 : index
    %c0_51 = arith.constant 0 : index
    %60 = vector.load %arg9[%c0_50, %c0_51] : memref<40x18xf32, #tpu.memory_space<vmem>>, vector<8x18xf32>
    tpu.vector_store %arg9[%c0_50, %c0_51], %59 {strides = array<i32>} : memref<40x18xf32, #tpu.memory_space<vmem>>, vector<8x18xf32>,
    %61 = vector.extract_strided_slice %58 {offsets = [0, 1], sizes = [8, 18], strides = [1, 1]} : vector<8x22xf32> to vector<8x18xf32>
    %c8_52 = arith.constant 8 : index
    %c0_53 = arith.constant 0 : index
    %62 = vector.load %arg9[%c8_52, %c0_53] : memref<40x18xf32, #tpu.memory_space<vmem>>, vector<8x18xf32>
    tpu.vector_store %arg9[%c8_52, %c0_53], %61 {strides = array<i32>} : memref<40x18xf32, #tpu.memory_space<vmem>>, vector<8x18xf32>,
    %63 = vector.extract_strided_slice %58 {offsets = [0, 2], sizes = [8, 18], strides = [1, 1]} : vector<8x22xf32> to vector<8x18xf32>
    %c16_54 = arith.constant 16 : index
    %c0_55 = arith.constant 0 : index
    %64 = vector.load %arg9[%c16_54, %c0_55] : memref<40x18xf32, #tpu.memory_space<vmem>>, vector<8x18xf32>
    tpu.vector_store %arg9[%c16_54, %c0_55], %63 {strides = array<i32>} : memref<40x18xf32, #tpu.memory_space<vmem>>, vector<8x18xf32>,
    %65 = vector.extract_strided_slice %58 {offsets = [0, 3], sizes = [8, 18], strides = [1, 1]} : vector<8x22xf32> to vector<8x18xf32>
    %c24_56 = arith.constant 24 : index
    %c0_57 = arith.constant 0 : index
    %66 = vector.load %arg9[%c24_56, %c0_57] : memref<40x18xf32, #tpu.memory_space<vmem>>, vector<8x18xf32>
    tpu.vector_store %arg9[%c24_56, %c0_57], %65 {strides = array<i32>} : memref<40x18xf32, #tpu.memory_space<vmem>>, vector<8x18xf32>,
    %67 = vector.extract_strided_slice %58 {offsets = [0, 4], sizes = [8, 18], strides = [1, 1]} : vector<8x22xf32> to vector<8x18xf32>
    %c32 = arith.constant 32 : index
    %c0_58 = arith.constant 0 : index
    %68 = vector.load %arg9[%c32, %c0_58] : memref<40x18xf32, #tpu.memory_space<vmem>>, vector<8x18xf32>
    tpu.vector_store %arg9[%c32, %c0_58], %67 {strides = array<i32>} : memref<40x18xf32, #tpu.memory_space<vmem>>, vector<8x18xf32>,
    %c0_59 = arith.constant 0 : index
    %c0_60 = arith.constant 0 : index
    %69 = vector.load %arg3[%c0_59, %c0_60] : memref<8x40xbf16, #tpu.memory_space<vmem>>, vector<8x40xbf16>
    %c0_61 = arith.constant 0 : index
    %c0_62 = arith.constant 0 : index
    %70 = vector.load %arg9[%c0_61, %c0_62] : memref<40x18xf32, #tpu.memory_space<vmem>>, vector<40x18xf32>
    %71 = arith.truncf %70 : vector<40x18xf32> to vector<40x18xbf16>
    %cst_63 = arith.constant dense<0.000000e+00> : vector<8x18xf32>
    %72 = tpu.matmul %69, %71, %cst_63 {dimension_numbers = #tpu.dot_dimension_numbers<[1], [0], [0], [1], [0, 0, 1, 1], [], []>} : vector<8x40xbf16>, vector<40x18xbf16>, vector<8x18xf32> -> vector<8x18xf32>
    %c0_64 = arith.constant 0 : index
    %c2_65 = arith.constant 2 : index
    %73 = vector.load %arg6[%c0_64, %c2_65] : memref<8x8xf32, #tpu.memory_space<vmem>>, vector<8x1xf32>
    %74 = vector.broadcast %73 : vector<8x1xf32> to vector<8x18xf32>
    %75 = arith.mulf %72, %74 : vector<8x18xf32>
    %c0_66 = arith.constant 0 : index
    %c3_67 = arith.constant 3 : index
    %76 = vector.load %arg6[%c0_66, %c3_67] : memref<8x8xf32, #tpu.memory_space<vmem>>, vector<8x1xf32>
    %77 = vector.broadcast %76 : vector<8x1xf32> to vector<8x18xf32>
    %78 = arith.addf %75, %77 : vector<8x18xf32>
    %cst_68 = arith.constant 0.000000e+00 : f32
    %79 = vector.broadcast %cst_68 : f32 to vector<8x18xf32>
    %80 = arith.maximumf %78, %79 : vector<8x18xf32>
    %81 = tpu.iota {dimensions = array<i32: 1>} : vector<1x18xi32>
    %c1_i32 = arith.constant 1 : i32
    %82 = vector.broadcast %c1_i32 : i32 to vector<1x18xi32>
    %83 = arith.cmpi sge, %81, %82 : vector<1x18xi32>
    %c17_i32 = arith.constant 17 : i32
    %84 = vector.broadcast %c17_i32 : i32 to vector<1x18xi32>
    %85 = arith.cmpi slt, %81, %84 : vector<1x18xi32>
    %86 = arith.andi %83, %85 : vector<1x18xi1>
    %cst_69 = arith.constant 0.000000e+00 : f32
    %87 = vector.shape_cast %86 : vector<1x18xi1> to vector<1x18xi1>
    %88 = vector.broadcast %87 : vector<1x18xi1> to vector<8x18xi1>
    %89 = vector.broadcast %cst_69 : f32 to vector<8x18xf32>
    %90 = arith.select %88, %80, %89 : vector<8x18xi1>, vector<8x18xf32>
    %91 = vector.extract_strided_slice %90 {offsets = [0, 0], sizes = [8, 16], strides = [1, 1]} : vector<8x18xf32> to vector<8x16xf32>
    %c0_70 = arith.constant 0 : index
    %c0_71 = arith.constant 0 : index
    %92 = vector.load %arg10[%c0_70, %c0_71] : memref<24x16xf32, #tpu.memory_space<vmem>>, vector<8x16xf32>
    tpu.vector_store %arg10[%c0_70, %c0_71], %91 {strides = array<i32>} : memref<24x16xf32, #tpu.memory_space<vmem>>, vector<8x16xf32>,
    %93 = vector.extract_strided_slice %90 {offsets = [0, 1], sizes = [8, 16], strides = [1, 1]} : vector<8x18xf32> to vector<8x16xf32>
    %c8_72 = arith.constant 8 : index
    %c0_73 = arith.constant 0 : index
    %94 = vector.load %arg10[%c8_72, %c0_73] : memref<24x16xf32, #tpu.memory_space<vmem>>, vector<8x16xf32>
    tpu.vector_store %arg10[%c8_72, %c0_73], %93 {strides = array<i32>} : memref<24x16xf32, #tpu.memory_space<vmem>>, vector<8x16xf32>,
    %95 = vector.extract_strided_slice %90 {offsets = [0, 2], sizes = [8, 16], strides = [1, 1]} : vector<8x18xf32> to vector<8x16xf32>
    %c16_74 = arith.constant 16 : index
    %c0_75 = arith.constant 0 : index
    %96 = vector.load %arg10[%c16_74, %c0_75] : memref<24x16xf32, #tpu.memory_space<vmem>>, vector<8x16xf32>
    tpu.vector_store %arg10[%c16_74, %c0_75], %95 {strides = array<i32>} : memref<24x16xf32, #tpu.memory_space<vmem>>, vector<8x16xf32>,
    %c0_76 = arith.constant 0 : index
    %c0_77 = arith.constant 0 : index
    %97 = vector.load %arg4[%c0_76, %c0_77] : memref<8x24xbf16, #tpu.memory_space<vmem>>, vector<8x24xbf16>
    %c0_78 = arith.constant 0 : index
    %c0_79 = arith.constant 0 : index
    %98 = vector.load %arg10[%c0_78, %c0_79] : memref<24x16xf32, #tpu.memory_space<vmem>>, vector<24x16xf32>
    %99 = arith.truncf %98 : vector<24x16xf32> to vector<24x16xbf16>
    %cst_80 = arith.constant dense<0.000000e+00> : vector<8x16xf32>
    %100 = tpu.matmul %97, %99, %cst_80 {dimension_numbers = #tpu.dot_dimension_numbers<[1], [0], [0], [1], [0, 0, 1, 1], [], []>} : vector<8x24xbf16>, vector<24x16xbf16>, vector<8x16xf32> -> vector<8x16xf32>
    %c0_81 = arith.constant 0 : index
    %c4_82 = arith.constant 4 : index
    %101 = vector.load %arg6[%c0_81, %c4_82] : memref<8x8xf32, #tpu.memory_space<vmem>>, vector<8x1xf32>
    %102 = vector.broadcast %101 : vector<8x1xf32> to vector<8x16xf32>
    %103 = arith.mulf %100, %102 : vector<8x16xf32>
    %c0_83 = arith.constant 0 : index
    %c5_84 = arith.constant 5 : index
    %104 = vector.load %arg6[%c0_83, %c5_84] : memref<8x8xf32, #tpu.memory_space<vmem>>, vector<8x1xf32>
    %105 = vector.broadcast %104 : vector<8x1xf32> to vector<8x16xf32>
    %106 = arith.addf %103, %105 : vector<8x16xf32>
    %cst_85 = arith.constant 0.000000e+00 : f32
    %107 = vector.broadcast %cst_85 : f32 to vector<8x16xf32>
    %108 = arith.maximumf %106, %107 : vector<8x16xf32>
    %c0_86 = arith.constant 0 : index
    %c0_87 = arith.constant 0 : index
    %109 = vector.load %arg5[%c0_86, %c0_87] : memref<8x4xbf16, #tpu.memory_space<vmem>>, vector<8x4xbf16>
    %110 = arith.truncf %1 : vector<4x16xf32> to vector<4x16xbf16>
    %cst_88 = arith.constant dense<0.000000e+00> : vector<8x16xf32>
    %111 = tpu.matmul %109, %110, %cst_88 {dimension_numbers = #tpu.dot_dimension_numbers<[1], [0], [0], [1], [0, 0, 1, 1], [], []>} : vector<8x4xbf16>, vector<4x16xbf16>, vector<8x16xf32> -> vector<8x16xf32>
    %c0_89 = arith.constant 0 : index
    %c6_90 = arith.constant 6 : index
    %112 = vector.load %arg6[%c0_89, %c6_90] : memref<8x8xf32, #tpu.memory_space<vmem>>, vector<8x1xf32>
    %113 = vector.broadcast %112 : vector<8x1xf32> to vector<8x16xf32>
    %114 = arith.mulf %111, %113 : vector<8x16xf32>
    %c0_91 = arith.constant 0 : index
    %c7 = arith.constant 7 : index
    %115 = vector.load %arg6[%c0_91, %c7] : memref<8x8xf32, #tpu.memory_space<vmem>>, vector<8x1xf32>
    %116 = vector.broadcast %115 : vector<8x1xf32> to vector<8x16xf32>
    %117 = arith.addf %114, %116 : vector<8x16xf32>
    %118 = arith.addf %108, %117 : vector<8x16xf32>
    %c0_92 = arith.constant 0 : index
    %c0_93 = arith.constant 0 : index
    %c0_94 = arith.constant 0 : index
    %119 = vector.load %arg7[%c0_92, %c0_93, %c0_94] : memref<1x8x16xf32, #tpu.memory_space<vmem>>, vector<1x8x16xf32>
    %120 = vector.shape_cast %119 : vector<1x8x16xf32> to vector<8x16xf32>
    %121 = vector.shape_cast %118 : vector<8x16xf32> to vector<1x8x16xf32>
    tpu.vector_store %arg7[%c0_92, %c0_93, %c0_94], %121 {strides = array<i32>} : memref<1x8x16xf32, #tpu.memory_space<vmem>>, vector<1x8x16xf32>,
    return
  }
  func.func @transform_0(%arg0: i32) -> (i32, i32, i32) {
    %c0_i32 = arith.constant 0 : i32
    %c0_i32_0 = arith.constant 0 : i32
    %c0_i32_1 = arith.constant 0 : i32
    return %arg0, %c0_i32, %c0_i32_0 : i32, i32, i32
  }
  func.func @transform_1(%arg0: i32) -> (i32, i32) {
    %c0_i32 = arith.constant 0 : i32
    %c0_i32_0 = arith.constant 0 : i32
    %c0_i32_1 = arith.constant 0 : i32
    return %c0_i32, %c0_i32_0 : i32, i32
  }
  func.func @transform_2(%arg0: i32) -> (i32, i32) {
    %c0_i32 = arith.constant 0 : i32
    %c0_i32_0 = arith.constant 0 : i32
    %c0_i32_1 = arith.constant 0 : i32
    return %c0_i32, %c0_i32_0 : i32, i32
  }
  func.func @transform_3(%arg0: i32) -> (i32, i32) {
    %c0_i32 = arith.constant 0 : i32
    %c0_i32_0 = arith.constant 0 : i32
    %c0_i32_1 = arith.constant 0 : i32
    return %c0_i32, %c0_i32_0 : i32, i32
  }
  func.func @transform_4(%arg0: i32) -> (i32, i32) {
    %c0_i32 = arith.constant 0 : i32
    %c0_i32_0 = arith.constant 0 : i32
    %c0_i32_1 = arith.constant 0 : i32
    return %c0_i32, %c0_i32_0 : i32, i32
  }
  func.func @transform_5(%arg0: i32) -> (i32, i32) {
    %c0_i32 = arith.constant 0 : i32
    %c0_i32_0 = arith.constant 0 : i32
    %c0_i32_1 = arith.constant 0 : i32
    return %c0_i32, %c0_i32_0 : i32, i32
  }
  func.func @transform_6(%arg0: i32) -> (i32, i32, i32) {
    %c0_i32 = arith.constant 0 : i32
    %c0_i32_0 = arith.constant 0 : i32
    %c0_i32_1 = arith.constant 0 : i32
    return %arg0, %c0_i32, %c0_i32_0 : i32, i32, i32
  }
}

</mosaic_0001>

<llo_original>
// kernel: resnet_block_forward.1
$region0: #{resnet_block_forward.1}
  #allocation0 [shape = 'u32[]', space=smem, size = 0x4, offset = 0x4, fixed_abs, tag = 'smem constant byte address 0x4 - core index']
  #allocation1 [shape = 'u32[72,128]{1,0:T(1,128)}', space=vmem, size = 0x9000, scoped, tag = 'internal scratch']
  #allocation2 [shape = 'f32[32,22]{1,0:T(8,128)}', space=vmem, size = 0x4000, scoped, tag = 'scratch operand']
  #allocation3 [shape = 'f32[40,18]{1,0:T(8,128)}', space=vmem, size = 0x5000, scoped, tag = 'scratch operand']
  #allocation4 [shape = 'f32[24,16]{1,0:T(8,128)}', space=vmem, size = 0x3000, scoped, tag = 'scratch operand']
  %s0 = inlined_call_operand.vmem [shape: f32[2,4,16], index: 0, kind: input, shape index: {}]
  %s1 = inlined_call_operand.vmem [shape: bf16[8,32], index: 1, kind: input, shape index: {}]
  %s2 = inlined_call_operand.vmem [shape: bf16[8,40], index: 2, kind: input, shape index: {}]
  %s3 = inlined_call_operand.vmem [shape: bf16[8,24], index: 3, kind: input, shape index: {}]
  %s4 = inlined_call_operand.vmem [shape: bf16[8,4], index: 4, kind: input, shape index: {}]
  %s5 = inlined_call_operand.vmem [shape: f32[8,8], index: 5, kind: input, shape index: {}]
  %s6 = inlined_call_operand.hbm [shape: f32[2,8,16], index: 6, kind: output, shape index: {}]
  %s7 = sld [smem:[#allocation0]]
  $region57: #{resnet_block_forward.1} parent=0
    _
  %s9 = ssub.s32 1, %s7
  %s10 = scalar_select 0, %s9, %s7
  $region1: #{resnet_block_forward.1} parent=0
    #allocation5 [shape = 'u8[8192]{0}', space=vmem, size = 0x2000, scoped, tag = 'output window, operand 0']
    #allocation6 [shape = 's32[2]{0}', space=sflag, size = 0x8, scoped, tag = 'scoped memory for resnet_block_forward.1']
    %11 = vsyncpa [#allocation6], 0
    %s12 = scalar_lea.sflag [#allocation6], 1
    %13 = vsyncpa %s12, 0
    loop: start=0, step=1, limit=4
    $region2: #{resnet_block_forward.1} parent=1 // loop_pre_header
      _
    $region3: #{resnet_block_forward.1} parent=1 // loop_header
      %s15 = sphi 0, %s19
      %p16 = scmp.ge.s32.totalorder %s15, 4
      %s25 = sphi 0, %s27
      %s28 = sphi 0, %s25
      %s29 = sphi 0, %s28
      %s45 = sphi 0, %s29
      %s49 = sphi 0, %s49
      %s51 = sphi 0, %s49
      %s52 = sphi 0, %s51
      %s66 = sphi 0, %s52
      %s70 = sphi 0, %s70
      %s72 = sphi 0, %s70
      %s73 = sphi 0, %s72
      %s87 = sphi 0, %s73
      %s91 = sphi 0, %s91
      %s93 = sphi 0, %s91
      %s94 = sphi 0, %s93
      %s108 = sphi 0, %s94
      %s112 = sphi 0, %s112
      %s114 = sphi 0, %s112
      %s115 = sphi 0, %s114
      %s129 = sphi 0, %s115
      %s133 = sphi 0, %s133
      %s135 = sphi 0, %s133
      %s136 = sphi 0, %s135
      %s150 = sphi 0, %s136
      %s156 = sphi 0, %s158
      %s159 = sphi 0, %s156
      %s160 = sphi 0, %s159
      %s176 = sphi 0, %s160
    $region4: #{resnet_block_forward.1} parent=1 // loop_header_branch
      %18 = sbr.rel (%p16) target = $region8
    $region5: #{resnet_block_forward.1} parent=1 // loop_body
      %s20 = ssub.s32 %s15, 1
      %s21 = ssub.s32 %s15, 2
      %s22 = sadd.s32 %s15, 1
      %s23 = ssub.s32 %s15, %s22
      %p24 = scmp.eq.s32.totalorder %s23, 0
      %s26 = sadd.s32 %s25, 1
      %s27 = scalar_select %p24, %s25, %s26
      %p30 = pneg %p24
      %p31 = scmp.eq.s32.totalorder %s15, 1
      %p32 = por %p30, %p31
      %p33 = scmp.ne.s32.totalorder %s25, %s28
      %p34 = scmp.eq.s32.totalorder %s15, 0
      %p35 = por %p33, %p34
      %p36 = scmp.ne.s32.totalorder %s25, %s28
      %p37 = scmp.eq.s32.totalorder %s20, 1
      %p38 = por %p36, %p37
      %p39 = scmp.ne.s32.totalorder %s28, %s29
      %p40 = scmp.eq.s32.totalorder %s20, 0
      %p41 = por %p39, %p40
      %p42 = scmp.ne.s32.totalorder %s28, %s29
      %p43 = scmp.eq.s32.totalorder %s21, 1
      %p44 = por %p42, %p43
      %p46 = scmp.ne.s32.totalorder %s29, %s45
      %p47 = scmp.eq.s32.totalorder %s21, 0
      %p48 = por %p46, %p47
      %s50 = sadd.s32 %s49, 1
      %p53 = scmp.eq.s32.totalorder %s15, 1
      %p54 = scmp.ne.s32.totalorder %s49, %s51
      %p55 = scmp.eq.s32.totalorder %s15, 0
      %p56 = por %p54, %p55
      %p57 = scmp.ne.s32.totalorder %s49, %s51
      %p58 = scmp.eq.s32.totalorder %s20, 1
      %p59 = por %p57, %p58
      %p60 = scmp.ne.s32.totalorder %s51, %s52
      %p61 = scmp.eq.s32.totalorder %s20, 0
      %p62 = por %p60, %p61
      %p63 = scmp.ne.s32.totalorder %s51, %s52
      %p64 = scmp.eq.s32.totalorder %s21, 1
      %p65 = por %p63, %p64
      %p67 = scmp.ne.s32.totalorder %s52, %s66
      %p68 = scmp.eq.s32.totalorder %s21, 0
      %p69 = por %p67, %p68
      %s71 = sadd.s32 %s70, 1
      %p74 = scmp.eq.s32.totalorder %s15, 1
      %p75 = scmp.ne.s32.totalorder %s70, %s72
      %p76 = scmp.eq.s32.totalorder %s15, 0
      %p77 = por %p75, %p76
      %p78 = scmp.ne.s32.totalorder %s70, %s72
      %p79 = scmp.eq.s32.totalorder %s20, 1
      %p80 = por %p78, %p79
      %p81 = scmp.ne.s32.totalorder %s72, %s73
      %p82 = scmp.eq.s32.totalorder %s20, 0
      %p83 = por %p81, %p82
      %p84 = scmp.ne.s32.totalorder %s72, %s73
      %p85 = scmp.eq.s32.totalorder %s21, 1
      %p86 = por %p84, %p85
      %p88 = scmp.ne.s32.totalorder %s73, %s87
      %p89 = scmp.eq.s32.totalorder %s21, 0
      %p90 = por %p88, %p89
      %s92 = sadd.s32 %s91, 1
      %p95 = scmp.eq.s32.totalorder %s15, 1
      %p96 = scmp.ne.s32.totalorder %s91, %s93
      %p97 = scmp.eq.s32.totalorder %s15, 0
      %p98 = por %p96, %p97
      %p99 = scmp.ne.s32.totalorder %s91, %s93
      %p100 = scmp.eq.s32.totalorder %s20, 1
      %p101 = por %p99, %p100
      %p102 = scmp.ne.s32.totalorder %s93, %s94
      %p103 = scmp.eq.s32.totalorder %s20, 0
      %p104 = por %p102, %p103
      %p105 = scmp.ne.s32.totalorder %s93, %s94
      %p106 = scmp.eq.s32.totalorder %s21, 1
      %p107 = por %p105, %p106
      %p109 = scmp.ne.s32.totalorder %s94, %s108
      %p110 = scmp.eq.s32.totalorder %s21, 0
      %p111 = por %p109, %p110
      %s113 = sadd.s32 %s112, 1
      %p116 = scmp.eq.s32.totalorder %s15, 1
      %p117 = scmp.ne.s32.totalorder %s112, %s114
      %p118 = scmp.eq.s32.totalorder %s15, 0
      %p119 = por %p117, %p118
      %p120 = scmp.ne.s32.totalorder %s112, %s114
      %p121 = scmp.eq.s32.totalorder %s20, 1
      %p122 = por %p120, %p121
      %p123 = scmp.ne.s32.totalorder %s114, %s115
      %p124 = scmp.eq.s32.totalorder %s20, 0
      %p125 = por %p123, %p124
      %p126 = scmp.ne.s32.totalorder %s114, %s115
      %p127 = scmp.eq.s32.totalorder %s21, 1
      %p128 = por %p126, %p127
      %p130 = scmp.ne.s32.totalorder %s115, %s129
      %p131 = scmp.eq.s32.totalorder %s21, 0
      %p132 = por %p130, %p131
      %s134 = sadd.s32 %s133, 1
      %p137 = scmp.eq.s32.totalorder %s15, 1
      %p138 = scmp.ne.s32.totalorder %s133, %s135
      %p139 = scmp.eq.s32.totalorder %s15, 0
      %p140 = por %p138, %p139
      %p141 = scmp.ne.s32.totalorder %s133, %s135
      %p142 = scmp.eq.s32.totalorder %s20, 1
      %p143 = por %p141, %p142
      %p144 = scmp.ne.s32.totalorder %s135, %s136
      %p145 = scmp.eq.s32.totalorder %s20, 0
      %p146 = por %p144, %p145
      %p147 = scmp.ne.s32.totalorder %s135, %s136
      %p148 = scmp.eq.s32.totalorder %s21, 1
      %p149 = por %p147, %p148
      %p151 = scmp.ne.s32.totalorder %s136, %s150
      %p152 = scmp.eq.s32.totalorder %s21, 0
      %p153 = por %p151, %p152
      %s154 = ssub.s32 %s15, %s22
      %p155 = scmp.eq.s32.totalorder %s154, 0
      %s157 = sadd.s32 %s156, 1
      %s158 = scalar_select %p155, %s156, %s157
      %p161 = pneg %p155
      %p162 = scmp.eq.s32.totalorder %s15, 1
      %p163 = por %p161, %p162
      %p164 = scmp.ne.s32.totalorder %s156, %s159
      %p165 = scmp.eq.s32.totalorder %s15, 0
      %p166 = por %p164, %p165
      %p167 = scmp.ne.s32.totalorder %s156, %s159
      %p168 = scmp.eq.s32.totalorder %s20, 1
      %p169 = por %p167, %p168
      %p170 = scmp.ne.s32.totalorder %s159, %s160
      %p171 = scmp.eq.s32.totalorder %s20, 0
      %p172 = por %p170, %p171
      %p173 = scmp.ne.s32.totalorder %s159, %s160
      %p174 = scmp.eq.s32.totalorder %s21, 1
      %p175 = por %p173, %p174
      %p177 = scmp.ne.s32.totalorder %s160, %s176
      %p178 = scmp.eq.s32.totalorder %s21, 0
      %p179 = por %p177, %p178
      %p180 = scmp.le.s32.totalorder 1, %s15
      %p181 = scmp.lt.s32.totalorder %s15, 3
      %p182 = pnand %p180, %p181
      %p183 = pneg %p182
      // Predicated region
      $region9: #{resnet_block_forward.1} parent=5 // pred_check
        _
      $region10: #{resnet_block_forward.1} parent=5 // pred_check_branch
        %185 = sbr.rel (%p182) target = $region12
      $region11: #{resnet_block_forward.1} parent=5 // pred_region
        %s186 = ssub.s32 %s15, 1
        // Predicated region
        $region13: #{resnet_block_forward.1} parent=11 // pred_check
          %p187 = pneg %p62
        $region14: #{resnet_block_forward.1} parent=11 // pred_check_branch
          %189 = sbr.rel (%p187) target = $region16
        $region15: #{resnet_block_forward.1} parent=11 // pred_region
          _
        $region16: #{resnet_block_forward.1} parent=11 // pred_fallthru
          _
        // Predicated region
        $region17: #{resnet_block_forward.1} parent=11 // pred_check
          %p190 = pneg %p83
        $region18: #{resnet_block_forward.1} parent=11 // pred_check_branch
          %192 = sbr.rel (%p190) target = $region20
        $region19: #{resnet_block_forward.1} parent=11 // pred_region
          _
        $region20: #{resnet_block_forward.1} parent=11 // pred_fallthru
          _
        // Predicated region
        $region21: #{resnet_block_forward.1} parent=11 // pred_check
          %p193 = pneg %p104
        $region22: #{resnet_block_forward.1} parent=11 // pred_check_branch
          %195 = sbr.rel (%p193) target = $region24
        $region23: #{resnet_block_forward.1} parent=11 // pred_region
          _
        $region24: #{resnet_block_forward.1} parent=11 // pred_fallthru
          _
        // Predicated region
        $region25: #{resnet_block_forward.1} parent=11 // pred_check
          %p196 = pneg %p125
        $region26: #{resnet_block_forward.1} parent=11 // pred_check_branch
          %198 = sbr.rel (%p196) target = $region28
        $region27: #{resnet_block_forward.1} parent=11 // pred_region
          _
        $region28: #{resnet_block_forward.1} parent=11 // pred_fallthru
          _
        // Predicated region
        $region29: #{resnet_block_forward.1} parent=11 // pred_check
          %p199 = pneg %p146
        $region30: #{resnet_block_forward.1} parent=11 // pred_check_branch
          %201 = sbr.rel (%p199) target = $region32
        $region31: #{resnet_block_forward.1} parent=11 // pred_region
          _
        $region32: #{resnet_block_forward.1} parent=11 // pred_fallthru
          _
      $region12: #{resnet_block_forward.1} parent=5 // pred_fallthru
        _
      %p202 = scmp.lt.s32.totalorder %s15, 2
      // Predicated region
      $region33: #{resnet_block_forward.1} parent=5 // pred_check
        %p203 = pneg %p202
      $region34: #{resnet_block_forward.1} parent=5 // pred_check_branch
        %205 = sbr.rel (%p203) target = $region36
      $region35: #{resnet_block_forward.1} parent=5 // pred_region
        // Predicated region
        $region37: #{resnet_block_forward.1} parent=35 // pred_check
          %p206 = pneg %p35
        $region38: #{resnet_block_forward.1} parent=35 // pred_check_branch
          %208 = sbr.rel (%p206) target = $region40
        $region39: #{resnet_block_forward.1} parent=35 // pred_region
          %p209 = scmp.lt.s32.totalorder %s15, 1
          %s210 = scalar_select %p209, %s15, 1
          %s211 = smul.addr %s210, 4
          %s212 = scalar_lea.vmem %s0, %s211
        $region40: #{resnet_block_forward.1} parent=35 // pred_fallthru
          _
      $region36: #{resnet_block_forward.1} parent=5 // pred_fallthru
        _
      %p213 = scmp.le.s32.totalorder 1, %s15
      %p214 = scmp.lt.s32.totalorder %s15, 3
      %p215 = pnand %p213, %p214
      %p216 = pneg %p215
      // Predicated region
      $region41: #{resnet_block_forward.1} parent=5 // pred_check
        _
      $region42: #{resnet_block_forward.1} parent=5 // pred_check_branch
        %218 = sbr.rel (%p215) target = $region44
      $region43: #{resnet_block_forward.1} parent=5 // pred_region
        %s219 = ssub.s32 %s15, 1
        %p220 = scmp.lt.s32.totalorder %s20, 1
        %s221 = scalar_select %p220, %s20, 1
        %s222 = smul.addr %s221, 4
        %s223 = scalar_lea.vmem %s0, %s222
        %p224 = pneg %p41
        %p225 = pneg %p38
        %p226 = pneg %p62
        %p227 = pneg %p59
        %p228 = pneg %p83
        %p229 = pneg %p80
        %p230 = pneg %p104
        %p231 = pneg %p101
        %p232 = pneg %p125
        %p233 = pneg %p122
        %p234 = pneg %p146
        %p235 = pneg %p143
        %p236 = pneg %p172
        %p237 = pneg %p169
        %s238 = sand.u32 %s159, 1
        %s239 = scalar_lea.sflag [#allocation6], %s238
        %s240 = sand.u32 %s159, 1
        %s241 = smul.addr %s240, 8
        %s242 = scalar_lea.vmem [#allocation5], %s241
        %p243 = scmp.lt.s32.totalorder %s20, 1
        %s244 = scalar_select %p243, %s20, 1
        %s245 = smul.addr %s244, 4
        %s246 = scalar_lea.vmem %s0, %s245
        %v248 = vld [vmem:[%s246] sm:$0xf]
        %vm249 = vcmask 44032
        %250 = vst.msk [vmem:[#allocation2] sm:$0xf] %vm249, 0.0
        %252 = vrot.lane.b32.xlu0 %v248, 6
        %v253 = vpop.permute.xlu0 %252
        %vm255 = vcmask 175152
        %256 = vst.msk [vmem:[#allocation2] sm:$0xf] %vm255, %v253
        %vm257 = vcmask 35840
        %258 = vst.msk [vmem:[#allocation2 + $0x4] sm:$0xf] %vm257, 0.0
        %vm259 = vcmask 175272
        %260 = vst.msk [vmem:[#allocation2 + $0x4] sm:$0xf] %vm259, 0.0
        %261 = vrot.lane.b32.xlu0 %v248, 5
        %v262 = vpop.permute.xlu0 %261
        %vm264 = vcmask 166952
        %265 = vst.msk [vmem:[#allocation2 + $0x4] sm:$0xf] %vm264, %v262
        %vm266 = vcmask 27648
        %267 = vst.msk [vmem:[#allocation2 + $0x8] sm:$0xf] %vm266, 0.0
        %vm268 = vcmask 175264
        %269 = vst.msk [vmem:[#allocation2 + $0x8] sm:$0xf] %vm268, 0.0
        %270 = vrot.lane.b32.xlu0 %v248, 4
        %v271 = vpop.permute.xlu0 %270
        %vm273 = vcmask 158752
        %274 = vst.msk [vmem:[#allocation2 + $0x8] sm:$0xf] %vm273, %v271
        %vm275 = vcmask 19456
        %276 = vst.msk [vmem:[#allocation2 + $0xc] sm:$0xf] %vm275, 0.0
        %vm277 = vcmask 175256
        %278 = vst.msk [vmem:[#allocation2 + $0xc] sm:$0xf] %vm277, 0.0
        %279 = vrot.lane.b32.xlu0 %v248, 3
        %v280 = vpop.permute.xlu0 %279
        %vm282 = vcmask 150552
        %283 = vst.msk [vmem:[#allocation2 + $0xc] sm:$0xf] %vm282, %v280
        %vm284 = vcmask 11264
        %285 = vst.msk [vmem:[#allocation2 + $0x10] sm:$0xf] %vm284, 0.0
        %vm286 = vcmask 175248
        %287 = vst.msk [vmem:[#allocation2 + $0x10] sm:$0xf] %vm286, 0.0
        %288 = vrot.lane.b32.xlu0 %v248, 2
        %v289 = vpop.permute.xlu0 %288
        %vm291 = vcmask 142352
        %292 = vst.msk [vmem:[#allocation2 + $0x10] sm:$0xf] %vm291, %v289
        %vm293 = vcmask 3072
        %294 = vst.msk [vmem:[#allocation2 + $0x14] sm:$0xf] %vm293, 0.0
        %vm295 = vcmask 175240
        %296 = vst.msk [vmem:[#allocation2 + $0x14] sm:$0xf] %vm295, 0.0
        %297 = vrot.lane.b32.xlu0 %v248, 1
        %v298 = vpop.permute.xlu0 %297
        %vm300 = vcmask 134152
        %301 = vst.msk [vmem:[#allocation2 + $0x14] sm:$0xf] %vm300, %v298
        %vm302 = vcmask 175232
        %303 = vst.msk [vmem:[#allocation2 + $0x18] sm:$0xf] %vm302, 0.0
        %vm304 = vcmask 125952
        %305 = vst.msk [vmem:[#allocation2 + $0x18] sm:$0xf] %vm304, %v248
        %vm306 = vcmask 175224
        %307 = vst.msk [vmem:[#allocation2 + $0x1c] sm:$0xf] %vm306, 0.0
        %308 = vrot.lane.b32.xlu0 %v248, 127
        %v309 = vpop.permute.xlu0 %308
        %vm311 = vcmask 117760
        %312 = vst.msk [vmem:[#allocation2 + $0x1c] sm:$0xf] %vm311, %v309
        %v313 = vld [vmem:[%s1] sm:$0xf]
        %v314 = vld [vmem:[#allocation2] sm:$0xff]
        %v315 = vld [vmem:[#allocation2 + $0x8] sm:$0xff]
        %v316 = vld [vmem:[#allocation2 + $0x10] sm:$0xff]
        %v317 = vld [vmem:[#allocation2 + $0x18] sm:$0xff]
        %v318 = vpack.c.bf16 %v315, %v314
        %v319 = vpack.c.bf16 %v317, %v316
        %vm320 = vcmask 261120
        %v322 = vsel %vm320, %v313, 0
        %324 = vmatpush.bf16.msra.mxu0 0
        %325 = vmatpush.bf16.msra.mxu0 0
        %326 = vmatpush.bf16.msra.mxu0 0
        %327 = vmatpush.bf16.msra.mxu0 0
        %328 = vmatpush.bf16.msra.mxu0 0
        %329 = vmatpush.bf16.msra.mxu0 0
        %330 = vmatpush.bf16.msra.mxu0 %v319
        %331 = vmatpush.bf16.msra.mxu0 %v318
        %332 = vmatmul.bf16.gmra.mxu0 %v322
        %v333 = vpop.f32.mrf.mxu0
        %v334 = vadd.f32 0.0, %v333
        %v335 = vpop.f32.mrf.mxu0
        %336 = vdwg.mxu0
        %v337 = vld [vmem:[%s5] sm:$0xff]
        %339 = vset.pattern.permute.xlu0 0
        %340 = vperm.xlu0 %339, %v337
        %v341 = vpop.permute.xlu0 %340
        %v343 = vmul.f32 %v334, %v341
        %344 = vset.pattern.permute.xlu0 1
        %345 = vperm.xlu0 %344, %v337
        %v346 = vpop.permute.xlu0 %345
        %v348 = vadd.f32 %v343, %v346
        %v349 = vmax.f32 %v348, 0.0
        %v350 = vlaneseq
        %v351 = vand.u32 %v350, 127
        %vm352 = vcmp.ge.s32.totalorder %v351, 3
        %vm353 = vcmp.lt.s32.totalorder %v351, 19
        %vm354 = vmand %vm352, %vm353
        %v355 = vsel %vm354, 1, 0
        %vm356 = vcmp.eq.s32.totalorder %v355, 1
        %v357 = vsel %vm356, %v349, 0.0
        %vm358 = vcmask 146432
        %359 = vst.msk [vmem:[#allocation3] sm:$0xff] %vm358, %v357
        %361 = vrot.lane.b32.xlu0 %v357, 127
        %v362 = vpop.permute.xlu0 %361
        %364 = vst.msk [vmem:[#allocation3 + $0x8] sm:$0xff] %vm358, %v362
        %365 = vrot.lane.b32.xlu0 %v357, 126
        %v366 = vpop.permute.xlu0 %365
        %368 = vst.msk [vmem:[#allocation3 + $0x10] sm:$0xff] %vm358, %v366
        %369 = vrot.lane.b32.xlu0 %v357, 125
        %v370 = vpop.permute.xlu0 %369
        %372 = vst.msk [vmem:[#allocation3 + $0x18] sm:$0xff] %vm358, %v370
        %373 = vrot.lane.b32.xlu0 %v357, 124
        %v374 = vpop.permute.xlu0 %373
        %376 = vst.msk [vmem:[#allocation3 + $0x20] sm:$0xff] %vm358, %v374
        %v377 = vld [vmem:[%s2] sm:$0xf]
        %v378 = vld [vmem:[#allocation3] sm:$0xff]
        %v379 = vld [vmem:[#allocation3 + $0x8] sm:$0xff]
        %v380 = vld [vmem:[#allocation3 + $0x10] sm:$0xff]
        %v381 = vld [vmem:[#allocation3 + $0x18] sm:$0xff]
        %v382 = vld [vmem:[#allocation3 + $0x20] sm:$0xff]
        %v383 = vpack.c.bf16 %v379, %v378
        %v384 = vpack.c.bf16 %v381, %v380
        %v385 = vpack.c.bf16 %v382, %v382
        %vm386 = vcmask 326656
        %v388 = vsel %vm386, %v377, 0
        %vm390 = vcmask 1043456
        %v392 = vsel %vm390, %v385, 0
        %394 = vmatpush.bf16.msra.mxu0 0
        %395 = vmatpush.bf16.msra.mxu0 0
        %396 = vmatpush.bf16.msra.mxu0 0
        %397 = vmatpush.bf16.msra.mxu0 0
        %398 = vmatpush.bf16.msra.mxu0 0
        %399 = vmatpush.bf16.msra.mxu0 %v392
        %400 = vmatpush.bf16.msra.mxu0 %v384
        %401 = vmatpush.bf16.msra.mxu0 %v383
        %402 = vmatmul.bf16.gmra.mxu0 %v388
        %v403 = vpop.f32.mrf.mxu0
        %v404 = vadd.f32 0.0, %v403
        %v405 = vpop.f32.mrf.mxu0
        %406 = vdwg.mxu0
        %v407 = vld [vmem:[%s5] sm:$0xff]
        %409 = vset.pattern.permute.xlu0 2
        %410 = vperm.xlu0 %409, %v407
        %v411 = vpop.permute.xlu0 %410
        %v413 = vmul.f32 %v404, %v411
        %414 = vset.pattern.permute.xlu0 3
        %415 = vperm.xlu0 %414, %v407
        %v416 = vpop.permute.xlu0 %415
        %v418 = vadd.f32 %v413, %v416
        %v419 = vmax.f32 %v418, 0.0
        %vm420 = vcmp.ge.s32.totalorder %v351, 1
        %vm421 = vcmp.lt.s32.totalorder %v351, 17
        %vm422 = vmand %vm420, %vm421
        %v423 = vsel %vm422, 1, 0
        %vm424 = vcmp.eq.s32.totalorder %v423, 1
        %v425 = vsel %vm424, %v419, 0.0
        %vm426 = vcmask 130048
        %427 = vst.msk [vmem:[#allocation4] sm:$0xff] %vm426, %v425
        %429 = vrot.lane.b32.xlu0 %v425, 127
        %v430 = vpop.permute.xlu0 %429
        %432 = vst.msk [vmem:[#allocation4 + $0x8] sm:$0xff] %vm426, %v430
        %433 = vrot.lane.b32.xlu0 %v425, 126
        %v434 = vpop.permute.xlu0 %433
        %436 = vst.msk [vmem:[#allocation4 + $0x10] sm:$0xff] %vm426, %v434
        %v437 = vld [vmem:[%s3] sm:$0xf]
        %v438 = vld [vmem:[#allocation4] sm:$0xff]
        %v439 = vld [vmem:[#allocation4 + $0x8] sm:$0xff]
        %v440 = vld [vmem:[#allocation4 + $0x10] sm:$0xff]
        %v441 = vpack.c.bf16 %v439, %v438
        %v442 = vpack.c.bf16 %v440, %v440
        %vm443 = vcmask 195584
        %v445 = vsel %vm443, %v437, 0
        %v448 = vsel %vm390, %v442, 0
        %450 = vmatpush.bf16.msra.mxu0 0
        %451 = vmatpush.bf16.msra.mxu0 0
        %452 = vmatpush.bf16.msra.mxu0 0
        %453 = vmatpush.bf16.msra.mxu0 0
        %454 = vmatpush.bf16.msra.mxu0 0
        %455 = vmatpush.bf16.msra.mxu0 0
        %456 = vmatpush.bf16.msra.mxu0 %v448
        %457 = vmatpush.bf16.msra.mxu0 %v441
        %458 = vmatmul.bf16.gmra.mxu0 %v445
        %v459 = vpop.f32.mrf.mxu0
        %v460 = vadd.f32 0.0, %v459
        %v461 = vpop.f32.mrf.mxu0
        %462 = vdwg.mxu0
        %v463 = vld [vmem:[%s5] sm:$0xff]
        %465 = vset.pattern.permute.xlu0 4
        %466 = vperm.xlu0 %465, %v463
        %v467 = vpop.permute.xlu0 %466
        %v469 = vmul.f32 %v460, %v467
        %470 = vset.pattern.permute.xlu0 5
        %471 = vperm.xlu0 %470, %v463
        %v472 = vpop.permute.xlu0 %471
        %v474 = vadd.f32 %v469, %v472
        %v475 = vmax.f32 %v474, 0.0
        %v476 = vld [vmem:[%s4] sm:$0xf]
        %v477 = vpack.c.bf16 %v248, %v248
        %vm478 = vcmask 31744
        %v480 = vsel %vm478, %v476, 0
        %vm482 = vcmask 1041408
        %v484 = vsel %vm482, %v477, 0
        %486 = vmatpush.bf16.msra.mxu0 0
        %487 = vmatpush.bf16.msra.mxu0 0
        %488 = vmatpush.bf16.msra.mxu0 0
        %489 = vmatpush.bf16.msra.mxu0 0
        %490 = vmatpush.bf16.msra.mxu0 0
        %491 = vmatpush.bf16.msra.mxu0 0
        %492 = vmatpush.bf16.msra.mxu0 0
        %493 = vmatpush.bf16.msra.mxu0 %v484
        %494 = vmatmul.bf16.gmra.mxu0 %v480
        %v495 = vpop.f32.mrf.mxu0
        %v496 = vadd.f32 0.0, %v495
        %v497 = vpop.f32.mrf.mxu0
        %498 = vdwg.mxu0
        %499 = vset.pattern.permute.xlu0 6
        %500 = vperm.xlu0 %499, %v463
        %v501 = vpop.permute.xlu0 %500
        %v503 = vmul.f32 %v496, %v501
        %504 = vset.pattern.permute.xlu0 7
        %505 = vperm.xlu0 %504, %v463
        %v506 = vpop.permute.xlu0 %505
        %v508 = vadd.f32 %v503, %v506
        %v509 = vadd.f32 %v475, %v508
        %510 = vst.msk [vmem:[%s242] sm:$0xff] %vm426, %v509
        %s511 = sand.u32 %s159, 1
        %s512 = scalar_lea.sflag [#allocation6], %s511
        %s513 = sand.u32 %s159, 1
        %s514 = smul.addr %s513, 8
        %s515 = scalar_lea.vmem [#allocation5], %s514
        // Predicated region
        $region45: #{resnet_block_forward.1} parent=43 // pred_check
          %p516 = pneg %p169
        $region46: #{resnet_block_forward.1} parent=43 // pred_check_branch
          %518 = sbr.rel (%p516) target = $region48
        $region47: #{resnet_block_forward.1} parent=43 // pred_region
          %520 = vsyncadd %s512, 0
          %s521 = smul.addr %s20, 8
          %s522 = scalar_lea.hbm %s6, %s521
          %s524 = sshll.u32 %s515, 4
          %s525 = int_to_ptr.vmem [resolvable:$true] %s524
          %s526 = sshll.u32 %s522, 4
          %s527 = int_to_ptr.hbm [resolvable:$true] %s526
          %529 = dma.vmem_to_hbm [thread:$0]  %s525, 128, %s527, %s512
        $region48: #{resnet_block_forward.1} parent=43 // pred_fallthru
          _
      $region44: #{resnet_block_forward.1} parent=5 // pred_fallthru
        _
      %p530 = scmp.le.s32.totalorder 2, %s15
      // Predicated region
      $region49: #{resnet_block_forward.1} parent=5 // pred_check
        %p531 = pneg %p530
      $region50: #{resnet_block_forward.1} parent=5 // pred_check_branch
        %533 = sbr.rel (%p531) target = $region52
      $region51: #{resnet_block_forward.1} parent=5 // pred_region
        %s534 = ssub.s32 %s15, 2
        // Predicated region
        $region53: #{resnet_block_forward.1} parent=51 // pred_check
          %p535 = pneg %p175
        $region54: #{resnet_block_forward.1} parent=51 // pred_check_branch
          %537 = sbr.rel (%p535) target = $region56
        $region55: #{resnet_block_forward.1} parent=51 // pred_region
          %s538 = sand.u32 %s160, 1
          %s539 = scalar_lea.sflag [#allocation6], %s538
          %s540 = sand.u32 %s160, 1
          %s541 = smul.addr %s540, 8
          %s542 = scalar_lea.vmem [#allocation5], %s541
          %544 = dma.done %s539, 128
        $region56: #{resnet_block_forward.1} parent=51 // pred_fallthru
          _
      $region52: #{resnet_block_forward.1} parent=5 // pred_fallthru
        _
    $region6: #{resnet_block_forward.1} parent=1 // loop_footer
      %s19 = sadd.s32 1, %s15
    $region7: #{resnet_block_forward.1} parent=1 // loop_footer_branch
      %14 = sbr.rel target = $region3
    $region8: #{resnet_block_forward.1} parent=1 // loop_exit
      _
    %545 = vsyncpa [#allocation6], 1
    %s546 = scalar_lea.sflag [#allocation6], 1
    %547 = vsyncpa %s546, 1

</llo_original>
